<compile_context>
chip_gen: v7x
topology: tpu7x:2x2x1
jax: 0.10.0
libtpu: 0.0.40
codegen_flags: <defaults>
</compile_context>

<pallas_src>
import functools

import jax
import jax.numpy as jnp
from jax.experimental import pallas as pl
from jax.experimental.pallas import tpu as pltpu


# ----------------------------- Pallas kernel --------------------------------

def _matmul_scale_bias_act_kernel(x_ref, w_ref, s_ref, b_ref, o_ref, acc_ref, *,
                                  apply_relu: bool, n_k: int):
    """Tiled matmul with fused per-channel scale, bias add and optional ReLU.

    Grid = (N_tiles, K_tiles); K (reduction) is the last grid axis, accumulated
    into a float32 VMEM scratch, written out on the final K step.

    Weight tiles may be int8 (weight-only quantization): they are cast to bf16
    in VMEM before the dot and the per-output-channel scale is applied in the
    epilogue, so the MXU always runs bf16 (or f32 for the tiny conv) and the
    path lowers on all TPU generations.
    """
    k = pl.program_id(1)

    @pl.when(k == 0)
    def _():
        acc_ref[...] = jnp.zeros_like(acc_ref)

    x = x_ref[...]
    w = w_ref[...]
    if w.dtype == jnp.int8:
        w = w.astype(jnp.bfloat16)          # weight-only dequant (scale in epilogue)
    if x.dtype != w.dtype:
        x = x.astype(w.dtype)
    acc_ref[...] += jnp.dot(x, w, preferred_element_type=jnp.float32)

    @pl.when(k == n_k - 1)
    def _():
        out = acc_ref[...] * s_ref[...] + b_ref[...]
        if apply_relu:
            out = jnp.maximum(out, 0.0)
        o_ref[...] = out.astype(o_ref.dtype)


def linear_pallas(x, w, b, scale=None, *, relu: bool, tk=None, tn=None,
                  out_dtype=None, vmem_limit_bytes=64 * 1024 * 1024):
    """y = (x @ dequant(w)) * scale + b (optionally ReLU'd) via a Pallas TPU kernel.

    x: (M, K) float32/bfloat16
    w: (K, N) float32 / bfloat16 / int8 (per-output-channel quantized)
    b: (N,)   float32
    scale: (N,) float32 per-output-channel dequant scale (None -> ones)
    """
    M, K = x.shape
    K2, N = w.shape
    assert K == K2 and b.shape == (N,)
    tk = K if tk is None else tk
    tn = N if tn is None else tn
    assert K % tk == 0 and N % tn == 0
    nk, nn = K // tk, N // tn
    out_dtype = x.dtype if out_dtype is None else out_dtype

    if scale is None:
        scale = jnp.ones((N,), jnp.float32)
    s2 = scale.reshape(1, N).astype(jnp.float32)
    b2 = b.reshape(1, N).astype(jnp.float32)

    kernel = functools.partial(_matmul_scale_bias_act_kernel,
                               apply_relu=relu, n_k=nk)

    return pl.pallas_call(
        kernel,
        out_shape=jax.ShapeDtypeStruct((M, N), out_dtype),
        grid_spec=pltpu.PrefetchScalarGridSpec(
            num_scalar_prefetch=0,
            grid=(nn, nk),
            in_specs=[
                pl.BlockSpec((M, tk), lambda j, k: (0, k)),   # activations
                pl.BlockSpec((tk, tn), lambda j, k: (k, j)),  # weights (streamed)
                pl.BlockSpec((1, tn), lambda j, k: (0, j)),   # per-channel scale
                pl.BlockSpec((1, tn), lambda j, k: (0, j)),   # bias
            ],
            out_specs=pl.BlockSpec((M, tn), lambda j, k: (0, j)),
            scratch_shapes=[pltpu.VMEM((M, tn), jnp.float32)],
        ),
        compiler_params=pltpu.CompilerParams(
            dimension_semantics=("parallel", "arbitrary"),
            vmem_limit_bytes=vmem_limit_bytes),
    )(x, w, s2, b2)


# --------------------------- generation tiling plan --------------------------

def _tile_plan():
    """(tk, tn) per FC layer + VMEM limit, chosen by TPU generation.

    v7x (2 TensorCores/chip): keep nn >= 2 so the 'parallel' j axis splits
    across both cores; stay under the 48 MiB scoped-VMEM budget.
    v5e/v6e (1 TC): full-N tiles -> contiguous weight DMAs, fewest grid steps.
    """
    try:
        kind = jax.devices()[0].device_kind.lower()
    except Exception:
        kind = ""
    if "v7" in kind:
        return dict(fc1=(3584, 2048), fc2=(4096, 2048), fc3=(4096, 512),
                    vmem=48 * 1024 * 1024)
    return dict(fc1=(3584, 4096), fc2=(4096, 4096), fc3=(4096, 1024),
                vmem=64 * 1024 * 1024)


# ------------------------------ VGG forward ---------------------------------

_CONV_K_PAD = 128   # im2col K = 9*3 = 27, zero-padded to a lane-aligned 128.


def im2col_3x3_same(x_nhwc):
    """3x3, stride 1, pad 1 patches. (N,H,W,C) -> (N*H*W, _CONV_K_PAD).

    Tap order (dy, dx, c); columns 27.._CONV_K_PAD-1 are zero padding.
    """
    N, H, W, C = x_nhwc.shape
    xp = jnp.pad(x_nhwc, ((0, 0), (1, 1), (1, 1), (0, 0)))
    taps = [xp[:, dy:dy + H, dx:dx + W, :] for dy in range(3) for dx in range(3)]
    patches = jnp.stack(taps, axis=3)                       # (N, H, W, 9, C)
    patches = patches.reshape(N * H * W, 9 * C)
    return jnp.pad(patches, ((0, 0), (0, _CONV_K_PAD - 9 * C)))


def _pad_to(n, mult):
    return ((n + mult - 1) // mult) * mult


def _quantize_int8(w):
    """Symmetric per-output-channel (column) int8 quantization.

    Returns (w_int8, scale) with w ~= w_int8 * scale[None, :].
    """
    amax = jnp.max(jnp.abs(w), axis=0, keepdims=True)            # (1, N)
    scale = jnp.where(amax > 0, amax / 127.0, 1.0)
    w_q = jnp.clip(jnp.round(w / scale), -127, 127).astype(jnp.int8)
    return w_q, scale.reshape(-1).astype(jnp.float32)


def init_vgg_params(key, num_classes=1000):
    """Deterministic synthetic weights mirroring VGG._initialize_weights()."""
    in_ch, feat_ch = 3, 512
    k_conv, k_fc1, k_fc2, k_fc3 = jax.random.split(key, 4)

    fan_in_conv = in_ch * 3 * 3
    conv_std = (2.0 / fan_in_conv) ** 0.5                    # kaiming_normal_
    # PyTorch conv weight layout (Cout, Cin, kh, kw) -> im2col layout
    # (kh*kw*Cin, Cout), zero-padded along K to _CONV_K_PAD for lane alignment.
    conv_w = conv_std * jax.random.normal(k_conv, (feat_ch, in_ch, 3, 3), jnp.float32)
    conv_w_mat = jnp.transpose(conv_w, (2, 3, 1, 0)).reshape(9 * in_ch, feat_ch)
    conv_w_mat = jnp.pad(conv_w_mat, ((0, _CONV_K_PAD - 9 * in_ch), (0, 0)))
    conv_b = jnp.zeros((feat_ch,), jnp.float32)

    # nn.Linear weights ~ N(0, 0.01); generated in (in, out) layout and
    # quantized to int8 with per-output-channel scales (weight streaming is the
    # binding resource at M=2; int8 halves HBM bytes vs bf16).
    fc1_w = 0.01 * jax.random.normal(k_fc1, (feat_ch * 7 * 7, 4096), jnp.float32)
    fc1_wq, fc1_s = _quantize_int8(fc1_w)
    fc1_b = jnp.zeros((4096,), jnp.float32)

    fc2_w = 0.01 * jax.random.normal(k_fc2, (4096, 4096), jnp.float32)
    fc2_wq, fc2_s = _quantize_int8(fc2_w)
    fc2_b = jnp.zeros((4096,), jnp.float32)

    # fc3 output padded to a multiple of 128 (1000 -> 1024); extra cols are zero
    # weights with unit scale and zero bias, then sliced away after the kernel.
    n_pad = _pad_to(num_classes, 128)
    fc3_w = 0.01 * jax.random.normal(k_fc3, (4096, num_classes), jnp.float32)
    fc3_wq, fc3_s = _quantize_int8(fc3_w)
    fc3_wq = jnp.pad(fc3_wq, ((0, 0), (0, n_pad - num_classes)))
    fc3_s = jnp.pad(fc3_s, (0, n_pad - num_classes), constant_values=1.0)
    fc3_b = jnp.zeros((n_pad,), jnp.float32)

    return dict(conv_w=conv_w_mat, conv_b=conv_b,
                fc1_w=fc1_wq, fc1_s=fc1_s, fc1_b=fc1_b,
                fc2_w=fc2_wq, fc2_s=fc2_s, fc2_b=fc2_b,
                fc3_w=fc3_wq, fc3_s=fc3_s, fc3_b=fc3_b,
                num_classes=num_classes)


def vgg_forward(params, x_nchw):
    """Pallas-backed forward. x_nchw: (N, 3, 7, 7) float32 -> (N, num_classes)."""
    N, C, H, W = x_nchw.shape
    num_classes = params["num_classes"]
    plan = _tile_plan()
    vmem = plan["vmem"]

    x_nhwc = jnp.transpose(x_nchw, (0, 2, 3, 1))

    # features: Conv2d(3->512, 3x3, pad 1) + ReLU  (im2col + fused matmul kernel)
    patches = im2col_3x3_same(x_nhwc)                         # (N*H*W, 128)
    feat = linear_pallas(patches, params["conv_w"], params["conv_b"],
                         relu=True, out_dtype=jnp.float32)
    feat = feat.reshape(N, H, W, 512)

    # x.view(N, -1) on NCHW  => flatten in (C, H, W) order.
    # Single cast to bf16 here; the FC chain stays bf16 end-to-end.
    flat = jnp.transpose(feat, (0, 3, 1, 2)).reshape(N, 512 * H * W)
    flat = flat.astype(jnp.bfloat16)

    tk1, tn1 = plan["fc1"]
    tk2, tn2 = plan["fc2"]
    tk3, tn3 = plan["fc3"]

    # classifier: Linear+ReLU+Dropout, Linear+ReLU+Dropout, Linear
    # (dropout = eval identity).  int8 weights, bf16 activations, f32 accum.
    h = linear_pallas(flat, params["fc1_w"], params["fc1_b"], params["fc1_s"],
                      relu=True, tk=tk1, tn=tn1, out_dtype=jnp.bfloat16,
                      vmem_limit_bytes=vmem)
    h = linear_pallas(h, params["fc2_w"], params["fc2_b"], params["fc2_s"],
                      relu=True, tk=tk2, tn=tn2, out_dtype=jnp.bfloat16,
                      vmem_limit_bytes=vmem)
    out = linear_pallas(h, params["fc3_w"], params["fc3_b"], params["fc3_s"],
                        relu=False, tk=tk3, tn=tn3, out_dtype=jnp.float32,
                        vmem_limit_bytes=vmem)
    return out[:, :num_classes]


def vgg_forward_reference(params, x_nchw):
    """Pure-JAX reference with the same quantized-weight treatment."""
    N, C, H, W = x_nchw.shape
    num_classes = params["num_classes"]
    x_nhwc = jnp.transpose(x_nchw, (0, 2, 3, 1))
    patches = im2col_3x3_same(x_nhwc)
    feat = jnp.maximum(
        jnp.dot(patches, params["conv_w"], preferred_element_type=jnp.float32)
        + params["conv_b"], 0.0)
    feat = feat.reshape(N, H, W, 512)
    flat = jnp.transpose(feat, (0, 3, 1, 2)).reshape(N, 512 * H * W)
    flat = flat.astype(jnp.bfloat16)

    def fc(x_bf16, w_q, s, b, relu):
        y = jnp.dot(x_bf16, w_q.astype(jnp.bfloat16),
                    preferred_element_type=jnp.float32) * s + b
        if relu:
            y = jnp.maximum(y, 0.0)
        return y

    h = fc(flat, params["fc1_w"], params["fc1_s"], params["fc1_b"], True)
    h = fc(h.astype(jnp.bfloat16),
           params["fc2_w"], params["fc2_s"], params["fc2_b"], True)
    out = fc(h.astype(jnp.bfloat16),
             params["fc3_w"], params["fc3_s"], params["fc3_b"], False)
    return out[:, :num_classes]


# --------------------------------- main --------------------------------------

if __name__ == "__main__":
    key = jax.random.PRNGKey(0)
    k_param, k_input = jax.random.split(key)

    num_classes = 1000
    params = init_vgg_params(k_param, num_classes=num_classes)

    # Small input (N=2, C=3, 7x7 spatial) so features output is (2, 512, 7, 7),
    # exactly what the hard-coded classifier expects.
    x = jax.random.normal(k_input, (2, 3, 7, 7), jnp.float32)

    out = jax.block_until_ready(vgg_forward(params, x))
    assert out.shape == (2, num_classes), out.shape

    ref = jax.block_until_ready(vgg_forward_reference(params, x))
    assert jnp.allclose(out, ref, rtol=2e-2, atol=2e-2), (
        float(jnp.max(jnp.abs(out - ref))))

    print("KERNEL_OK")
</pallas_src>

<mosaic_0001>
module attributes {stable_mosaic.version = 11 : i64} {
  func.func @_matmul_scale_bias_act_kernel(%arg0: i32, %arg1: i32, %arg2: memref<98x128xf32, #tpu.memory_space<vmem>>, %arg3: memref<128x512xf32, #tpu.memory_space<vmem>>, %arg4: memref<1x512xf32, #tpu.memory_space<vmem>>, %arg5: memref<1x512xf32, #tpu.memory_space<vmem>>, %arg6: memref<98x512xf32, #tpu.memory_space<vmem>>, %arg7: memref<98x512xf32, #tpu.memory_space<vmem>>) attributes {dimension_semantics = [#tpu.dimension_semantics<parallel>, #tpu.dimension_semantics<arbitrary>], iteration_bounds = array<i64: 1, 1>, scalar_prefetch = 0 : i64, scratch_operands = 1 : i64, tpu.core_type = #tpu.core_type<tc>, window_params = [{transform_indices = @transform_0, window_bounds = array<i64: 98, 128>}, {transform_indices = @transform_1, window_bounds = array<i64: 128, 512>}, {transform_indices = @transform_2, window_bounds = array<i64: 1, 512>}, {transform_indices = @transform_3, window_bounds = array<i64: 1, 512>}, {transform_indices = @transform_4, window_bounds = array<i64: 98, 512>}]} {
    %c0_i32 = arith.constant 0 : i32
    %0 = arith.cmpi eq, %arg1, %c0_i32 : i32
    %1 = arith.extui %0 : i1 to i32
    %c0_i32_0 = arith.constant 0 : i32
    %2 = arith.cmpi ne, %1, %c0_i32_0 : i32
    scf.if %2 {
      %cst_10 = arith.constant 0.000000e+00 : f32
      %12 = vector.broadcast %cst_10 : f32 to vector<98x512xf32>
      %c0_11 = arith.constant 0 : index
      %c0_12 = arith.constant 0 : index
      %13 = vector.load %arg7[%c0_11, %c0_12] : memref<98x512xf32, #tpu.memory_space<vmem>>, vector<98x512xf32>
      tpu.vector_store %arg7[%c0_11, %c0_12], %12 {strides = array<i32>} : memref<98x512xf32, #tpu.memory_space<vmem>>, vector<98x512xf32>,
    } else {
    }
    %c0 = arith.constant 0 : index
    %c0_1 = arith.constant 0 : index
    %3 = vector.load %arg2[%c0, %c0_1] : memref<98x128xf32, #tpu.memory_space<vmem>>, vector<98x128xf32>
    %c0_2 = arith.constant 0 : index
    %c0_3 = arith.constant 0 : index
    %4 = vector.load %arg3[%c0_2, %c0_3] : memref<128x512xf32, #tpu.memory_space<vmem>>, vector<128x512xf32>
    %c0_4 = arith.constant 0 : index
    %c0_5 = arith.constant 0 : index
    %5 = vector.load %arg7[%c0_4, %c0_5] : memref<98x512xf32, #tpu.memory_space<vmem>>, vector<98x512xf32>
    %cst = arith.constant dense<0.000000e+00> : vector<98x512xf32>
    %6 = tpu.matmul %3, %4, %cst {dimension_numbers = #tpu.dot_dimension_numbers<[1], [0], [0], [1], [0, 0, 1, 1], [], []>} : vector<98x128xf32>, vector<128x512xf32>, vector<98x512xf32> -> vector<98x512xf32>
    %7 = arith.addf %5, %6 : vector<98x512xf32>
    %c0_6 = arith.constant 0 : index
    %c0_7 = arith.constant 0 : index
    %8 = vector.load %arg7[%c0_6, %c0_7] : memref<98x512xf32, #tpu.memory_space<vmem>>, vector<98x512xf32>
    tpu.vector_store %arg7[%c0_6, %c0_7], %7 {strides = array<i32>} : memref<98x512xf32, #tpu.memory_space<vmem>>, vector<98x512xf32>,
    %c0_i32_8 = arith.constant 0 : i32
    %9 = arith.cmpi eq, %arg1, %c0_i32_8 : i32
    %10 = arith.extui %9 : i1 to i32
    %c0_i32_9 = arith.constant 0 : i32
    %11 = arith.cmpi ne, %10, %c0_i32_9 : i32
    scf.if %11 {
      %c0_10 = arith.constant 0 : index
      %c0_11 = arith.constant 0 : index
      %12 = vector.load %arg7[%c0_10, %c0_11] : memref<98x512xf32, #tpu.memory_space<vmem>>, vector<98x512xf32>
      %c0_12 = arith.constant 0 : index
      %c0_13 = arith.constant 0 : index
      %13 = vector.load %arg4[%c0_12, %c0_13] : memref<1x512xf32, #tpu.memory_space<vmem>>, vector<1x512xf32>
      %14 = vector.broadcast %13 : vector<1x512xf32> to vector<98x512xf32>
      %15 = arith.mulf %12, %14 : vector<98x512xf32>
      %c0_14 = arith.constant 0 : index
      %c0_15 = arith.constant 0 : index
      %16 = vector.load %arg5[%c0_14, %c0_15] : memref<1x512xf32, #tpu.memory_space<vmem>>, vector<1x512xf32>
      %17 = vector.broadcast %16 : vector<1x512xf32> to vector<98x512xf32>
      %18 = arith.addf %15, %17 : vector<98x512xf32>
      %cst_16 = arith.constant 0.000000e+00 : f32
      %19 = vector.broadcast %cst_16 : f32 to vector<98x512xf32>
      %20 = arith.maximumf %18, %19 : vector<98x512xf32>
      %c0_17 = arith.constant 0 : index
      %c0_18 = arith.constant 0 : index
      %21 = vector.load %arg6[%c0_17, %c0_18] : memref<98x512xf32, #tpu.memory_space<vmem>>, vector<98x512xf32>
      tpu.vector_store %arg6[%c0_17, %c0_18], %20 {strides = array<i32>} : memref<98x512xf32, #tpu.memory_space<vmem>>, vector<98x512xf32>,
    } else {
    }
    return
  }
  func.func @transform_0(%arg0: i32, %arg1: i32) -> (i32, i32) {
    %c0_i32 = arith.constant 0 : i32
    %c0_i32_0 = arith.constant 0 : i32
    return %c0_i32, %arg1 : i32, i32
  }
  func.func @transform_1(%arg0: i32, %arg1: i32) -> (i32, i32) {
    %c0_i32 = arith.constant 0 : i32
    return %arg1, %arg0 : i32, i32
  }
  func.func @transform_2(%arg0: i32, %arg1: i32) -> (i32, i32) {
    %c0_i32 = arith.constant 0 : i32
    %c0_i32_0 = arith.constant 0 : i32
    return %c0_i32, %arg0 : i32, i32
  }
  func.func @transform_3(%arg0: i32, %arg1: i32) -> (i32, i32) {
    %c0_i32 = arith.constant 0 : i32
    %c0_i32_0 = arith.constant 0 : i32
    return %c0_i32, %arg0 : i32, i32
  }
  func.func @transform_4(%arg0: i32, %arg1: i32) -> (i32, i32) {
    %c0_i32 = arith.constant 0 : i32
    %c0_i32_0 = arith.constant 0 : i32
    return %c0_i32, %arg0 : i32, i32
  }
}

</mosaic_0001>

<llo_original>
// kernel: tpu_custom_call.1
$region0: #{tpu_custom_call.1}
  #allocation0 [shape = 'u32[]', space=smem, size = 0x4, offset = 0x4, fixed_abs, tag = 'smem constant byte address 0x4 - core index']
  #allocation1 [shape = 'u32[144,128]{1,0:T(1,128)}', space=vmem, size = 0x12000, scoped, tag = 'internal scratch']
  #allocation2 [shape = 'f32[98,512]{1,0:T(8,128)}', space=vmem, size = 0x34000, scoped, tag = 'scratch operand']
  %s0 = inlined_call_operand.hbm [shape: f32[98,128], index: 0, kind: input, shape index: {}]
  %s1 = inlined_call_operand.hbm [shape: f32[128,512], index: 1, kind: input, shape index: {}]
  %s2 = inlined_call_operand.hbm [shape: f32[1,512], index: 2, kind: input, shape index: {}]
  %s3 = inlined_call_operand.hbm [shape: f32[1,512], index: 3, kind: input, shape index: {}]
  %s4 = inlined_call_operand.hbm [shape: f32[98,512], index: 4, kind: output, shape index: {}]
  %s5 = sld [smem:[#allocation0]]
  $region50: #{tpu_custom_call.1} parent=0
    _
  %s7 = ssub.s32 1, %s5
  %s8 = scalar_select 0, %s7, %s5
  $region1: #{tpu_custom_call.1} parent=0
    #allocation3 [shape = 'u8[53248]{0}', space=vmem, size = 0xd000, scoped, tag = 'input window, operand 0, single buffered']
    #allocation4 [shape = 's32[1]{0}', space=sflag, size = 0x4, scoped, tag = 'scoped memory for tpu_custom_call.1']
    #allocation5 [shape = 's32[1]{0}', space=sflag, size = 0x4, scoped, tag = 'scoped memory for tpu_custom_call.1']
    #allocation6 [shape = 'u8[262144]{0}', space=vmem, size = 0x40000, scoped, tag = 'input window, operand 1, single buffered']
    #allocation7 [shape = 's32[1]{0}', space=sflag, size = 0x4, scoped, tag = 'scoped memory for tpu_custom_call.1']
    #allocation8 [shape = 'u8[2048]{0}', space=vmem, size = 0x800, scoped, tag = 'input window, operand 2, single buffered']
    #allocation9 [shape = 'u8[2048]{0}', space=vmem, size = 0x800, scoped, tag = 'input window, operand 3, single buffered']
    #allocation10 [shape = 's32[1]{0}', space=sflag, size = 0x4, scoped, tag = 'scoped memory for tpu_custom_call.1']
    #allocation11 [shape = 'u8[212992]{0}', space=vmem, size = 0x34000, scoped, tag = 'output window, operand 0, single buffered']
    %9 = vsyncpa [#allocation4], 0
    %10 = vsyncpa [#allocation7], 0
    %11 = vsyncpa [#allocation10], 0
    %12 = vsyncpa [#allocation5], 0
    // Predicated region
    $region2: #{tpu_custom_call.1} parent=1 // pred_check
      _
    $region3: #{tpu_custom_call.1} parent=1 // pred_check_branch
      %14 = sbr.rel (0) target = $region5
    $region4: #{tpu_custom_call.1} parent=1 // pred_region
      %s16 = ssub.s32 1664, 1664
      %17 = vsyncadd [#allocation4], %s16
      %s18 = sshll.u32 [#allocation3], 4
      %s19 = int_to_ptr.vmem [resolvable:$true] %s18
      %24 = dma.hbm_to_vmem [thread:$0]  %s0, 1664, %s19, [#allocation4], 128, 128, 8
    $region5: #{tpu_custom_call.1} parent=1 // pred_fallthru
      _
    // Predicated region
    $region6: #{tpu_custom_call.1} parent=1 // pred_check
      _
    $region7: #{tpu_custom_call.1} parent=1 // pred_check_branch
      %26 = sbr.rel (0) target = $region9
    $region8: #{tpu_custom_call.1} parent=1 // pred_region
      %s28 = ssub.s32 8192, 8192
      %29 = vsyncadd [#allocation7], %s28
      %s30 = sshll.u32 [#allocation6], 4
      %s31 = int_to_ptr.vmem [resolvable:$true] %s30
      %36 = dma.hbm_to_vmem [thread:$0]  %s1, 8192, %s31, [#allocation7], 512, 512, 32
    $region9: #{tpu_custom_call.1} parent=1 // pred_fallthru
      _
    // Predicated region
    $region10: #{tpu_custom_call.1} parent=1 // pred_check
      _
    $region11: #{tpu_custom_call.1} parent=1 // pred_check_branch
      %38 = sbr.rel (0) target = $region13
    $region12: #{tpu_custom_call.1} parent=1 // pred_region
      %s40 = ssub.s32 64, 64
      %41 = vsyncadd [#allocation7], %s40
      %s43 = sshll.u32 [#allocation8], 4
      %s44 = int_to_ptr.vmem [resolvable:$true] %s43
      %46 = dma.hbm_to_vmem [thread:$0]  %s2, 64, %s44, [#allocation7]
    $region13: #{tpu_custom_call.1} parent=1 // pred_fallthru
      _
    // Predicated region
    $region14: #{tpu_custom_call.1} parent=1 // pred_check
      _
    $region15: #{tpu_custom_call.1} parent=1 // pred_check_branch
      %48 = sbr.rel (0) target = $region17
    $region16: #{tpu_custom_call.1} parent=1 // pred_region
      %s50 = ssub.s32 64, 64
      %51 = vsyncadd [#allocation10], %s50
      %s53 = sshll.u32 [#allocation9], 4
      %s54 = int_to_ptr.vmem [resolvable:$true] %s53
      %56 = dma.hbm_to_vmem [thread:$0]  %s3, 64, %s54, [#allocation10]
    $region17: #{tpu_custom_call.1} parent=1 // pred_fallthru
      _
    // Predicated region
    $region18: #{tpu_custom_call.1} parent=1 // pred_check
      _
    $region19: #{tpu_custom_call.1} parent=1 // pred_check_branch
      %58 = sbr.rel (0) target = $region21
    $region20: #{tpu_custom_call.1} parent=1 // pred_region
      %59 = dma.done [#allocation4], 1664
    $region21: #{tpu_custom_call.1} parent=1 // pred_fallthru
      _
    // Predicated region
    $region22: #{tpu_custom_call.1} parent=1 // pred_check
      _
    $region23: #{tpu_custom_call.1} parent=1 // pred_check_branch
      %61 = sbr.rel (0) target = $region25
    $region24: #{tpu_custom_call.1} parent=1 // pred_region
      %62 = dma.done [#allocation7], 8192
    $region25: #{tpu_custom_call.1} parent=1 // pred_fallthru
      _
    // Predicated region
    $region26: #{tpu_custom_call.1} parent=1 // pred_check
      _
    $region27: #{tpu_custom_call.1} parent=1 // pred_check_branch
      %64 = sbr.rel (0) target = $region29
    $region28: #{tpu_custom_call.1} parent=1 // pred_region
      %65 = dma.done [#allocation7], 64
    $region29: #{tpu_custom_call.1} parent=1 // pred_fallthru
      _
    // Predicated region
    $region30: #{tpu_custom_call.1} parent=1 // pred_check
      _
    $region31: #{tpu_custom_call.1} parent=1 // pred_check_branch
      %67 = sbr.rel (0) target = $region33
    $region32: #{tpu_custom_call.1} parent=1 // pred_region
      %68 = dma.done [#allocation10], 64
    $region33: #{tpu_custom_call.1} parent=1 // pred_fallthru
      _
    %p69 = scmp.eq.s32.totalorder 0, 0
    // Predicated region
    $region34: #{tpu_custom_call.1} parent=1 // pred_check
      %p70 = pneg %p69
    $region35: #{tpu_custom_call.1} parent=1 // pred_check_branch
      %72 = sbr.rel (%p70) target = $region37
    $region36: #{tpu_custom_call.1} parent=1 // pred_region
      %73 = vst [vmem:[#allocation2] sm:$0xff] 0.0
      %74 = vst [vmem:[#allocation2 + $0x8] sm:$0xff] 0.0
      %75 = vst [vmem:[#allocation2 + $0x10] sm:$0xff] 0.0
      %76 = vst [vmem:[#allocation2 + $0x18] sm:$0xff] 0.0
      %77 = vst [vmem:[#allocation2 + $0x20] sm:$0xff] 0.0
      %78 = vst [vmem:[#allocation2 + $0x28] sm:$0xff] 0.0
      %79 = vst [vmem:[#allocation2 + $0x30] sm:$0xff] 0.0
      %80 = vst [vmem:[#allocation2 + $0x38] sm:$0xff] 0.0
      %81 = vst [vmem:[#allocation2 + $0x40] sm:$0xff] 0.0
      %82 = vst [vmem:[#allocation2 + $0x48] sm:$0xff] 0.0
      %83 = vst [vmem:[#allocation2 + $0x50] sm:$0xff] 0.0
      %84 = vst [vmem:[#allocation2 + $0x58] sm:$0xff] 0.0
      %85 = vst [vmem:[#allocation2 + $0x60] sm:$0xff] 0.0
      %86 = vst [vmem:[#allocation2 + $0x68] sm:$0xff] 0.0
      %87 = vst [vmem:[#allocation2 + $0x70] sm:$0xff] 0.0
      %88 = vst [vmem:[#allocation2 + $0x78] sm:$0xff] 0.0
      %89 = vst [vmem:[#allocation2 + $0x80] sm:$0xff] 0.0
      %90 = vst [vmem:[#allocation2 + $0x88] sm:$0xff] 0.0
      %91 = vst [vmem:[#allocation2 + $0x90] sm:$0xff] 0.0
      %92 = vst [vmem:[#allocation2 + $0x98] sm:$0xff] 0.0
      %93 = vst [vmem:[#allocation2 + $0xa0] sm:$0xff] 0.0
      %94 = vst [vmem:[#allocation2 + $0xa8] sm:$0xff] 0.0
      %95 = vst [vmem:[#allocation2 + $0xb0] sm:$0xff] 0.0
      %96 = vst [vmem:[#allocation2 + $0xb8] sm:$0xff] 0.0
      %97 = vst [vmem:[#allocation2 + $0xc0] sm:$0xff] 0.0
      %98 = vst [vmem:[#allocation2 + $0xc8] sm:$0xff] 0.0
      %99 = vst [vmem:[#allocation2 + $0xd0] sm:$0xff] 0.0
      %100 = vst [vmem:[#allocation2 + $0xd8] sm:$0xff] 0.0
      %101 = vst [vmem:[#allocation2 + $0xe0] sm:$0xff] 0.0
      %102 = vst [vmem:[#allocation2 + $0xe8] sm:$0xff] 0.0
      %103 = vst [vmem:[#allocation2 + $0xf0] sm:$0xff] 0.0
      %104 = vst [vmem:[#allocation2 + $0xf8] sm:$0xff] 0.0
      %105 = vst [vmem:[#allocation2 + $0x100] sm:$0xff] 0.0
      %106 = vst [vmem:[#allocation2 + $0x108] sm:$0xff] 0.0
      %107 = vst [vmem:[#allocation2 + $0x110] sm:$0xff] 0.0
      %108 = vst [vmem:[#allocation2 + $0x118] sm:$0xff] 0.0
      %109 = vst [vmem:[#allocation2 + $0x120] sm:$0xff] 0.0
      %110 = vst [vmem:[#allocation2 + $0x128] sm:$0xff] 0.0
      %111 = vst [vmem:[#allocation2 + $0x130] sm:$0xff] 0.0
      %112 = vst [vmem:[#allocation2 + $0x138] sm:$0xff] 0.0
      %113 = vst [vmem:[#allocation2 + $0x140] sm:$0xff] 0.0
      %114 = vst [vmem:[#allocation2 + $0x148] sm:$0xff] 0.0
      %115 = vst [vmem:[#allocation2 + $0x150] sm:$0xff] 0.0
      %116 = vst [vmem:[#allocation2 + $0x158] sm:$0xff] 0.0
      %117 = vst [vmem:[#allocation2 + $0x160] sm:$0xff] 0.0
      %118 = vst [vmem:[#allocation2 + $0x168] sm:$0xff] 0.0
      %119 = vst [vmem:[#allocation2 + $0x170] sm:$0xff] 0.0
      %120 = vst [vmem:[#allocation2 + $0x178] sm:$0xff] 0.0
      %121 = vst [vmem:[#allocation2 + $0x180] sm:$0x3] 0.0
      %122 = vst [vmem:[#allocation2 + $0x188] sm:$0x3] 0.0
      %123 = vst [vmem:[#allocation2 + $0x190] sm:$0x3] 0.0
      %124 = vst [vmem:[#allocation2 + $0x198] sm:$0x3] 0.0
    $region37: #{tpu_custom_call.1} parent=1 // pred_fallthru
      _
    %v125 = vld [vmem:[#allocation3] sm:$0xff]
    %v126 = vld [vmem:[#allocation3 + $0x8] sm:$0xff]
    %v127 = vld [vmem:[#allocation3 + $0x10] sm:$0xff]
    %v128 = vld [vmem:[#allocation3 + $0x18] sm:$0xff]
    %v129 = vld [vmem:[#allocation3 + $0x20] sm:$0xff]
    %v130 = vld [vmem:[#allocation3 + $0x28] sm:$0xff]
    %v131 = vld [vmem:[#allocation3 + $0x30] sm:$0xff]
    %v132 = vld [vmem:[#allocation3 + $0x38] sm:$0xff]
    %v133 = vld [vmem:[#allocation3 + $0x40] sm:$0xff]
    %v134 = vld [vmem:[#allocation3 + $0x48] sm:$0xff]
    %v135 = vld [vmem:[#allocation3 + $0x50] sm:$0xff]
    %v136 = vld [vmem:[#allocation3 + $0x58] sm:$0xff]
    %v137 = vld [vmem:[#allocation3 + $0x60] sm:$0x3]
    %v138 = vld [vmem:[#allocation6] sm:$0xff]
    %v139 = vld [vmem:[#allocation6 + $0x8] sm:$0xff]
    %v140 = vld [vmem:[#allocation6 + $0x10] sm:$0xff]
    %v141 = vld [vmem:[#allocation6 + $0x18] sm:$0xff]
    %v142 = vld [vmem:[#allocation6 + $0x20] sm:$0xff]
    %v143 = vld [vmem:[#allocation6 + $0x28] sm:$0xff]
    %v144 = vld [vmem:[#allocation6 + $0x30] sm:$0xff]
    %v145 = vld [vmem:[#allocation6 + $0x38] sm:$0xff]
    %v146 = vld [vmem:[#allocation6 + $0x40] sm:$0xff]
    %v147 = vld [vmem:[#allocation6 + $0x48] sm:$0xff]
    %v148 = vld [vmem:[#allocation6 + $0x50] sm:$0xff]
    %v149 = vld [vmem:[#allocation6 + $0x58] sm:$0xff]
    %v150 = vld [vmem:[#allocation6 + $0x60] sm:$0xff]
    %v151 = vld [vmem:[#allocation6 + $0x68] sm:$0xff]
    %v152 = vld [vmem:[#allocation6 + $0x70] sm:$0xff]
    %v153 = vld [vmem:[#allocation6 + $0x78] sm:$0xff]
    %v154 = vld [vmem:[#allocation6 + $0x80] sm:$0xff]
    %v155 = vld [vmem:[#allocation6 + $0x88] sm:$0xff]
    %v156 = vld [vmem:[#allocation6 + $0x90] sm:$0xff]
    %v157 = vld [vmem:[#allocation6 + $0x98] sm:$0xff]
    %v158 = vld [vmem:[#allocation6 + $0xa0] sm:$0xff]
    %v159 = vld [vmem:[#allocation6 + $0xa8] sm:$0xff]
    %v160 = vld [vmem:[#allocation6 + $0xb0] sm:$0xff]
    %v161 = vld [vmem:[#allocation6 + $0xb8] sm:$0xff]
    %v162 = vld [vmem:[#allocation6 + $0xc0] sm:$0xff]
    %v163 = vld [vmem:[#allocation6 + $0xc8] sm:$0xff]
    %v164 = vld [vmem:[#allocation6 + $0xd0] sm:$0xff]
    %v165 = vld [vmem:[#allocation6 + $0xd8] sm:$0xff]
    %v166 = vld [vmem:[#allocation6 + $0xe0] sm:$0xff]
    %v167 = vld [vmem:[#allocation6 + $0xe8] sm:$0xff]
    %v168 = vld [vmem:[#allocation6 + $0xf0] sm:$0xff]
    %v169 = vld [vmem:[#allocation6 + $0xf8] sm:$0xff]
    %v170 = vld [vmem:[#allocation6 + $0x100] sm:$0xff]
    %v171 = vld [vmem:[#allocation6 + $0x108] sm:$0xff]
    %v172 = vld [vmem:[#allocation6 + $0x110] sm:$0xff]
    %v173 = vld [vmem:[#allocation6 + $0x118] sm:$0xff]
    %v174 = vld [vmem:[#allocation6 + $0x120] sm:$0xff]
    %v175 = vld [vmem:[#allocation6 + $0x128] sm:$0xff]
    %v176 = vld [vmem:[#allocation6 + $0x130] sm:$0xff]
    %v177 = vld [vmem:[#allocation6 + $0x138] sm:$0xff]
    %v178 = vld [vmem:[#allocation6 + $0x140] sm:$0xff]
    %v179 = vld [vmem:[#allocation6 + $0x148] sm:$0xff]
    %v180 = vld [vmem:[#allocation6 + $0x150] sm:$0xff]
    %v181 = vld [vmem:[#allocation6 + $0x158] sm:$0xff]
    %v182 = vld [vmem:[#allocation6 + $0x160] sm:$0xff]
    %v183 = vld [vmem:[#allocation6 + $0x168] sm:$0xff]
    %v184 = vld [vmem:[#allocation6 + $0x170] sm:$0xff]
    %v185 = vld [vmem:[#allocation6 + $0x178] sm:$0xff]
    %v186 = vld [vmem:[#allocation6 + $0x180] sm:$0xff]
    %v187 = vld [vmem:[#allocation6 + $0x188] sm:$0xff]
    %v188 = vld [vmem:[#allocation6 + $0x190] sm:$0xff]
    %v189 = vld [vmem:[#allocation6 + $0x198] sm:$0xff]
    %v190 = vld [vmem:[#allocation6 + $0x1a0] sm:$0xff]
    %v191 = vld [vmem:[#allocation6 + $0x1a8] sm:$0xff]
    %v192 = vld [vmem:[#allocation6 + $0x1b0] sm:$0xff]
    %v193 = vld [vmem:[#allocation6 + $0x1b8] sm:$0xff]
    %v194 = vld [vmem:[#allocation6 + $0x1c0] sm:$0xff]
    %v195 = vld [vmem:[#allocation6 + $0x1c8] sm:$0xff]
    %v196 = vld [vmem:[#allocation6 + $0x1d0] sm:$0xff]
    %v197 = vld [vmem:[#allocation6 + $0x1d8] sm:$0xff]
    %v198 = vld [vmem:[#allocation6 + $0x1e0] sm:$0xff]
    %v199 = vld [vmem:[#allocation6 + $0x1e8] sm:$0xff]
    %v200 = vld [vmem:[#allocation6 + $0x1f0] sm:$0xff]
    %v201 = vld [vmem:[#allocation6 + $0x1f8] sm:$0xff]
    %v202 = vld [vmem:[#allocation2] sm:$0xff]
    %v203 = vld [vmem:[#allocation2 + $0x8] sm:$0xff]
    %v204 = vld [vmem:[#allocation2 + $0x10] sm:$0xff]
    %v205 = vld [vmem:[#allocation2 + $0x18] sm:$0xff]
    %v206 = vld [vmem:[#allocation2 + $0x20] sm:$0xff]
    %v207 = vld [vmem:[#allocation2 + $0x28] sm:$0xff]
    %v208 = vld [vmem:[#allocation2 + $0x30] sm:$0xff]
    %v209 = vld [vmem:[#allocation2 + $0x38] sm:$0xff]
    %v210 = vld [vmem:[#allocation2 + $0x40] sm:$0xff]
    %v211 = vld [vmem:[#allocation2 + $0x48] sm:$0xff]
    %v212 = vld [vmem:[#allocation2 + $0x50] sm:$0xff]
    %v213 = vld [vmem:[#allocation2 + $0x58] sm:$0xff]
    %v214 = vld [vmem:[#allocation2 + $0x60] sm:$0xff]
    %v215 = vld [vmem:[#allocation2 + $0x68] sm:$0xff]
    %v216 = vld [vmem:[#allocation2 + $0x70] sm:$0xff]
    %v217 = vld [vmem:[#allocation2 + $0x78] sm:$0xff]
    %v218 = vld [vmem:[#allocation2 + $0x80] sm:$0xff]
    %v219 = vld [vmem:[#allocation2 + $0x88] sm:$0xff]
    %v220 = vld [vmem:[#allocation2 + $0x90] sm:$0xff]
    %v221 = vld [vmem:[#allocation2 + $0x98] sm:$0xff]
    %v222 = vld [vmem:[#allocation2 + $0xa0] sm:$0xff]
    %v223 = vld [vmem:[#allocation2 + $0xa8] sm:$0xff]
    %v224 = vld [vmem:[#allocation2 + $0xb0] sm:$0xff]
    %v225 = vld [vmem:[#allocation2 + $0xb8] sm:$0xff]
    %v226 = vld [vmem:[#allocation2 + $0xc0] sm:$0xff]
    %v227 = vld [vmem:[#allocation2 + $0xc8] sm:$0xff]
    %v228 = vld [vmem:[#allocation2 + $0xd0] sm:$0xff]
    %v229 = vld [vmem:[#allocation2 + $0xd8] sm:$0xff]
    %v230 = vld [vmem:[#allocation2 + $0xe0] sm:$0xff]
    %v231 = vld [vmem:[#allocation2 + $0xe8] sm:$0xff]
    %v232 = vld [vmem:[#allocation2 + $0xf0] sm:$0xff]
    %v233 = vld [vmem:[#allocation2 + $0xf8] sm:$0xff]
    %v234 = vld [vmem:[#allocation2 + $0x100] sm:$0xff]
    %v235 = vld [vmem:[#allocation2 + $0x108] sm:$0xff]
    %v236 = vld [vmem:[#allocation2 + $0x110] sm:$0xff]
    %v237 = vld [vmem:[#allocation2 + $0x118] sm:$0xff]
    %v238 = vld [vmem:[#allocation2 + $0x120] sm:$0xff]
    %v239 = vld [vmem:[#allocation2 + $0x128] sm:$0xff]
    %v240 = vld [vmem:[#allocation2 + $0x130] sm:$0xff]
    %v241 = vld [vmem:[#allocation2 + $0x138] sm:$0xff]
    %v242 = vld [vmem:[#allocation2 + $0x140] sm:$0xff]
    %v243 = vld [vmem:[#allocation2 + $0x148] sm:$0xff]
    %v244 = vld [vmem:[#allocation2 + $0x150] sm:$0xff]
    %v245 = vld [vmem:[#allocation2 + $0x158] sm:$0xff]
    %v246 = vld [vmem:[#allocation2 + $0x160] sm:$0xff]
    %v247 = vld [vmem:[#allocation2 + $0x168] sm:$0xff]
    %v248 = vld [vmem:[#allocation2 + $0x170] sm:$0xff]
    %v249 = vld [vmem:[#allocation2 + $0x178] sm:$0xff]
    %v250 = vld [vmem:[#allocation2 + $0x180] sm:$0x3]
    %v251 = vld [vmem:[#allocation2 + $0x188] sm:$0x3]
    %v252 = vld [vmem:[#allocation2 + $0x190] sm:$0x3]
    %v253 = vld [vmem:[#allocation2 + $0x198] sm:$0x3]
    %254 = vmatprep.subr.mxu0 %v139
    %255 = vmatpush1.msra.mxu0 %v138
    %256 = vmatprep.subr.mxu0 %v143
    %257 = vmatpush1.msra.mxu0 %v142
    %258 = vmatprep.subr.mxu0 %v147
    %259 = vmatpush1.msra.mxu0 %v146
    %260 = vmatprep.subr.mxu0 %v151
    %261 = vmatpush1.msra.mxu0 %v150
    %262 = vmatprep.subr.mxu0 %v155
    %263 = vmatpush1.msra.mxu0 %v154
    %264 = vmatprep.subr.mxu0 %v159
    %265 = vmatpush1.msra.mxu0 %v158
    %266 = vmatprep.subr.mxu0 %v163
    %267 = vmatpush1.msra.mxu0 %v162
    %268 = vmatprep.subr.mxu0 %v167
    %269 = vmatpush1.msra.mxu0 %v166
    %270 = vmatprep.subr.mxu0 %v171
    %271 = vmatpush1.msra.mxu0 %v170
    %272 = vmatprep.subr.mxu0 %v175
    %273 = vmatpush1.msra.mxu0 %v174
    %274 = vmatprep.subr.mxu0 %v179
    %275 = vmatpush1.msra.mxu0 %v178
    %276 = vmatprep.subr.mxu0 %v183
    %277 = vmatpush1.msra.mxu0 %v182
    %278 = vmatprep.subr.mxu0 %v187
    %279 = vmatpush1.msra.mxu0 %v186
    %280 = vmatprep.subr.mxu0 %v191
    %281 = vmatpush1.msra.mxu0 %v190
    %282 = vmatprep.subr.mxu0 %v195
    %283 = vmatpush1.msra.mxu0 %v194
    %284 = vmatprep.subr.mxu0 %v199
    %285 = vmatpush1.msra.mxu0 %v198
    %286 = vmatprep.subr.mxu0 0.0
    %287 = vmatpush1.msra.mxu0 0.0
    %288 = vmatprep.subr.mxu0 0.0
    %289 = vmatpush1.msra.mxu0 0.0
    %290 = vmatprep.subr.mxu0 0.0
    %291 = vmatpush1.msra.mxu0 0.0
    %292 = vmatprep.subr.mxu0 0.0
    %293 = vmatpush1.msra.mxu0 0.0
    %294 = vmatprep.subr.mxu0 0.0
    %295 = vmatpush1.msra.mxu0 0.0
    %296 = vmatprep.subr.mxu0 0.0
    %297 = vmatpush1.msra.mxu0 0.0
    %298 = vmatprep.subr.mxu0 0.0
    %299 = vmatpush1.msra.mxu0 0.0
    %300 = vmatprep.subr.mxu0 0.0
    %301 = vmatpush1.msra.mxu0 0.0
    %302 = vmatprep.subr.mxu0 0.0
    %303 = vmatpush1.msra.mxu0 0.0
    %304 = vmatprep.subr.mxu0 0.0
    %305 = vmatpush1.msra.mxu0 0.0
    %306 = vmatprep.subr.mxu0 0.0
    %307 = vmatpush1.msra.mxu0 0.0
    %308 = vmatprep.subr.mxu0 0.0
    %309 = vmatpush1.msra.mxu0 0.0
    %310 = vmatprep.subr.mxu0 0.0
    %311 = vmatpush1.msra.mxu0 0.0
    %312 = vmatprep.subr.mxu0 0.0
    %313 = vmatpush1.msra.mxu0 0.0
    %314 = vmatprep.subr.mxu0 0.0
    %315 = vmatpush1.msra.mxu0 0.0
    %316 = vmatprep.subr.mxu0 0.0
    %317 = vmatpush1.msra.mxu0 0.0
    %318 = vmatprep.mubr.f32.mxu0 0.0
    %319 = vmatmul.mubr.f32.gmra.mrb[0].mxu0 %v125
    %v320 = vpop.f32.mrb[0].mxu0
    %v321 = vadd.f32 0.0, %v320
    %v322 = vpop.f32.mrb[0].mxu0
    %v323 = vadd.f32 0.0, %v322
    %324 = vmatprep.mubr.f32.mxu0 0.0
    %325 = vmatmul.mubr.f32.gmra.mrb[0].mxu0 %v126
    %v326 = vpop.f32.mrb[0].mxu0
    %v327 = vadd.f32 0.0, %v326
    %v328 = vpop.f32.mrb[0].mxu0
    %v329 = vadd.f32 0.0, %v328
    %330 = vmatprep.mubr.f32.mxu0 0.0
    %331 = vmatmul.mubr.f32.gmra.mrb[0].mxu0 %v127
    %v332 = vpop.f32.mrb[0].mxu0
    %v333 = vadd.f32 0.0, %v332
    %v334 = vpop.f32.mrb[0].mxu0
    %v335 = vadd.f32 0.0, %v334
    %336 = vmatprep.mubr.f32.mxu0 0.0
    %337 = vmatmul.mubr.f32.gmra.mrb[0].mxu0 %v128
    %v338 = vpop.f32.mrb[0].mxu0
    %v339 = vadd.f32 0.0, %v338
    %v340 = vpop.f32.mrb[0].mxu0
    %v341 = vadd.f32 0.0, %v340
    %342 = vmatprep.mubr.f32.mxu0 0.0
    %343 = vmatmul.mubr.f32.gmra.mrb[0].mxu0 %v129
    %v344 = vpop.f32.mrb[0].mxu0
    %v345 = vadd.f32 0.0, %v344
    %v346 = vpop.f32.mrb[0].mxu0
    %v347 = vadd.f32 0.0, %v346
    %348 = vmatprep.mubr.f32.mxu0 0.0
    %349 = vmatmul.mubr.f32.gmra.mrb[0].mxu0 %v130
    %v350 = vpop.f32.mrb[0].mxu0
    %v351 = vadd.f32 0.0, %v350
    %v352 = vpop.f32.mrb[0].mxu0
    %v353 = vadd.f32 0.0, %v352
    %354 = vmatprep.mubr.f32.mxu0 0.0
    %355 = vmatmul.mubr.f32.gmra.mrb[0].mxu0 %v131
    %v356 = vpop.f32.mrb[0].mxu0
    %v357 = vadd.f32 0.0, %v356
    %v358 = vpop.f32.mrb[0].mxu0
    %v359 = vadd.f32 0.0, %v358
    %360 = vmatprep.mubr.f32.mxu0 0.0
    %361 = vmatmul.mubr.f32.gmra.mrb[0].mxu0 %v132
    %v362 = vpop.f32.mrb[0].mxu0
    %v363 = vadd.f32 0.0, %v362
    %v364 = vpop.f32.mrb[0].mxu0
    %v365 = vadd.f32 0.0, %v364
    %366 = vmatprep.mubr.f32.mxu0 0.0
    %367 = vmatmul.mubr.f32.gmra.mrb[0].mxu0 %v133
    %v368 = vpop.f32.mrb[0].mxu0
    %v369 = vadd.f32 0.0, %v368
    %v370 = vpop.f32.mrb[0].mxu0
    %v371 = vadd.f32 0.0, %v370
    %372 = vmatprep.mubr.f32.mxu0 0.0
    %373 = vmatmul.mubr.f32.gmra.mrb[0].mxu0 %v134
    %v374 = vpop.f32.mrb[0].mxu0
    %v375 = vadd.f32 0.0, %v374
    %v376 = vpop.f32.mrb[0].mxu0
    %v377 = vadd.f32 0.0, %v376
    %378 = vmatprep.mubr.f32.mxu0 0.0
    %379 = vmatmul.mubr.f32.gmra.mrb[0].mxu0 %v135
    %v380 = vpop.f32.mrb[0].mxu0
    %v381 = vadd.f32 0.0, %v380
    %v382 = vpop.f32.mrb[0].mxu0
    %v383 = vadd.f32 0.0, %v382
    %384 = vmatprep.mubr.f32.mxu0 0.0
    %385 = vmatmul.mubr.f32.gmra.mrb[0].mxu0 %v136
    %v386 = vpop.f32.mrb[0].mxu0
    %v387 = vadd.f32 0.0, %v386
    %v388 = vpop.f32.mrb[0].mxu0
    %v389 = vadd.f32 0.0, %v388
    %390 = vmatprep.mubr.f32.mxu0 0.0
    %391 = vmatmul.mubr.f32.gmra.mrb[0].mxu0 %v137
    %v392 = vpop.f32.mrb[0].mxu0
    %v393 = vadd.f32 0.0, %v392
    %v394 = vpop.f32.mrb[0].mxu0
    %v395 = vadd.f32 0.0, %v394
    %396 = vdwg.mxu0
    %397 = vmatprep.subr.mxu0 %v141
    %398 = vmatpush1.msra.mxu0 %v140
    %399 = vmatprep.subr.mxu0 %v145
    %400 = vmatpush1.msra.mxu0 %v144
    %401 = vmatprep.subr.mxu0 %v149
    %402 = vmatpush1.msra.mxu0 %v148
    %403 = vmatprep.subr.mxu0 %v153
    %404 = vmatpush1.msra.mxu0 %v152
    %405 = vmatprep.subr.mxu0 %v157
    %406 = vmatpush1.msra.mxu0 %v156
    %407 = vmatprep.subr.mxu0 %v161
    %408 = vmatpush1.msra.mxu0 %v160
    %409 = vmatprep.subr.mxu0 %v165
    %410 = vmatpush1.msra.mxu0 %v164
    %411 = vmatprep.subr.mxu0 %v169
    %412 = vmatpush1.msra.mxu0 %v168
    %413 = vmatprep.subr.mxu0 %v173
    %414 = vmatpush1.msra.mxu0 %v172
    %415 = vmatprep.subr.mxu0 %v177
    %416 = vmatpush1.msra.mxu0 %v176
    %417 = vmatprep.subr.mxu0 %v181
    %418 = vmatpush1.msra.mxu0 %v180
    %419 = vmatprep.subr.mxu0 %v185
    %420 = vmatpush1.msra.mxu0 %v184
    %421 = vmatprep.subr.mxu0 %v189
    %422 = vmatpush1.msra.mxu0 %v188
    %423 = vmatprep.subr.mxu0 %v193
    %424 = vmatpush1.msra.mxu0 %v192
    %425 = vmatprep.subr.mxu0 %v197
    %426 = vmatpush1.msra.mxu0 %v196
    %427 = vmatprep.subr.mxu0 %v201
    %428 = vmatpush1.msra.mxu0 %v200
    %429 = vmatprep.subr.mxu0 0.0
    %430 = vmatpush1.msra.mxu0 0.0
    %431 = vmatprep.subr.mxu0 0.0
    %432 = vmatpush1.msra.mxu0 0.0
    %433 = vmatprep.subr.mxu0 0.0
    %434 = vmatpush1.msra.mxu0 0.0
    %435 = vmatprep.subr.mxu0 0.0
    %436 = vmatpush1.msra.mxu0 0.0
    %437 = vmatprep.subr.mxu0 0.0
    %438 = vmatpush1.msra.mxu0 0.0
    %439 = vmatprep.subr.mxu0 0.0
    %440 = vmatpush1.msra.mxu0 0.0
    %441 = vmatprep.subr.mxu0 0.0
    %442 = vmatpush1.msra.mxu0 0.0
    %443 = vmatprep.subr.mxu0 0.0
    %444 = vmatpush1.msra.mxu0 0.0
    %445 = vmatprep.subr.mxu0 0.0
    %446 = vmatpush1.msra.mxu0 0.0
    %447 = vmatprep.subr.mxu0 0.0
    %448 = vmatpush1.msra.mxu0 0.0
    %449 = vmatprep.subr.mxu0 0.0
    %450 = vmatpush1.msra.mxu0 0.0
    %451 = vmatprep.subr.mxu0 0.0
    %452 = vmatpush1.msra.mxu0 0.0
    %453 = vmatprep.subr.mxu0 0.0
    %454 = vmatpush1.msra.mxu0 0.0
    %455 = vmatprep.subr.mxu0 0.0
    %456 = vmatpush1.msra.mxu0 0.0
    %457 = vmatprep.subr.mxu0 0.0
    %458 = vmatpush1.msra.mxu0 0.0
    %459 = vmatprep.subr.mxu0 0.0
    %460 = vmatpush1.msra.mxu0 0.0
    %461 = vmatprep.mubr.f32.mxu0 0.0
    %462 = vmatmul.mubr.f32.gmra.mrb[0].mxu0 %v125
    %v463 = vpop.f32.mrb[0].mxu0
    %v464 = vadd.f32 0.0, %v463
    %v465 = vpop.f32.mrb[0].mxu0
    %v466 = vadd.f32 0.0, %v465
    %467 = vmatprep.mubr.f32.mxu0 0.0
    %468 = vmatmul.mubr.f32.gmra.mrb[0].mxu0 %v126
    %v469 = vpop.f32.mrb[0].mxu0
    %v470 = vadd.f32 0.0, %v469
    %v471 = vpop.f32.mrb[0].mxu0
    %v472 = vadd.f32 0.0, %v471
    %473 = vmatprep.mubr.f32.mxu0 0.0
    %474 = vmatmul.mubr.f32.gmra.mrb[0].mxu0 %v127
    %v475 = vpop.f32.mrb[0].mxu0
    %v476 = vadd.f32 0.0, %v475
    %v477 = vpop.f32.mrb[0].mxu0
    %v478 = vadd.f32 0.0, %v477
    %479 = vmatprep.mubr.f32.mxu0 0.0
    %480 = vmatmul.mubr.f32.gmra.mrb[0].mxu0 %v128
    %v481 = vpop.f32.mrb[0].mxu0
    %v482 = vadd.f32 0.0, %v481
    %v483 = vpop.f32.mrb[0].mxu0
    %v484 = vadd.f32 0.0, %v483
    %485 = vmatprep.mubr.f32.mxu0 0.0
    %486 = vmatmul.mubr.f32.gmra.mrb[0].mxu0 %v129
    %v487 = vpop.f32.mrb[0].mxu0
    %v488 = vadd.f32 0.0, %v487
    %v489 = vpop.f32.mrb[0].mxu0
    %v490 = vadd.f32 0.0, %v489
    %491 = vmatprep.mubr.f32.mxu0 0.0
    %492 = vmatmul.mubr.f32.gmra.mrb[0].mxu0 %v130
    %v493 = vpop.f32.mrb[0].mxu0
    %v494 = vadd.f32 0.0, %v493
    %v495 = vpop.f32.mrb[0].mxu0
    %v496 = vadd.f32 0.0, %v495
    %497 = vmatprep.mubr.f32.mxu0 0.0
    %498 = vmatmul.mubr.f32.gmra.mrb[0].mxu0 %v131
    %v499 = vpop.f32.mrb[0].mxu0
    %v500 = vadd.f32 0.0, %v499
    %v501 = vpop.f32.mrb[0].mxu0
    %v502 = vadd.f32 0.0, %v501
    %503 = vmatprep.mubr.f32.mxu0 0.0
    %504 = vmatmul.mubr.f32.gmra.mrb[0].mxu0 %v132
    %v505 = vpop.f32.mrb[0].mxu0
    %v506 = vadd.f32 0.0, %v505
    %v507 = vpop.f32.mrb[0].mxu0
    %v508 = vadd.f32 0.0, %v507
    %509 = vmatprep.mubr.f32.mxu0 0.0
    %510 = vmatmul.mubr.f32.gmra.mrb[0].mxu0 %v133
    %v511 = vpop.f32.mrb[0].mxu0
    %v512 = vadd.f32 0.0, %v511
    %v513 = vpop.f32.mrb[0].mxu0
    %v514 = vadd.f32 0.0, %v513
    %515 = vmatprep.mubr.f32.mxu0 0.0
    %516 = vmatmul.mubr.f32.gmra.mrb[0].mxu0 %v134
    %v517 = vpop.f32.mrb[0].mxu0
    %v518 = vadd.f32 0.0, %v517
    %v519 = vpop.f32.mrb[0].mxu0
    %v520 = vadd.f32 0.0, %v519
    %521 = vmatprep.mubr.f32.mxu0 0.0
    %522 = vmatmul.mubr.f32.gmra.mrb[0].mxu0 %v135
    %v523 = vpop.f32.mrb[0].mxu0
    %v524 = vadd.f32 0.0, %v523
    %v525 = vpop.f32.mrb[0].mxu0
    %v526 = vadd.f32 0.0, %v525
    %527 = vmatprep.mubr.f32.mxu0 0.0
    %528 = vmatmul.mubr.f32.gmra.mrb[0].mxu0 %v136
    %v529 = vpop.f32.mrb[0].mxu0
    %v530 = vadd.f32 0.0, %v529
    %v531 = vpop.f32.mrb[0].mxu0
    %v532 = vadd.f32 0.0, %v531
    %533 = vmatprep.mubr.f32.mxu0 0.0
    %534 = vmatmul.mubr.f32.gmra.mrb[0].mxu0 %v137
    %v535 = vpop.f32.mrb[0].mxu0
    %v536 = vadd.f32 0.0, %v535
    %v537 = vpop.f32.mrb[0].mxu0
    %v538 = vadd.f32 0.0, %v537
    %539 = vdwg.mxu0
    %v540 = vadd.f32 %v202, %v321
    %v541 = vadd.f32 %v203, %v323
    %v542 = vadd.f32 %v204, %v464
    %v543 = vadd.f32 %v205, %v466
    %v544 = vadd.f32 %v206, %v327
    %v545 = vadd.f32 %v207, %v329
    %v546 = vadd.f32 %v208, %v470
    %v547 = vadd.f32 %v209, %v472
    %v548 = vadd.f32 %v210, %v333
    %v549 = vadd.f32 %v211, %v335
    %v550 = vadd.f32 %v212, %v476
    %v551 = vadd.f32 %v213, %v478
    %v552 = vadd.f32 %v214, %v339
    %v553 = vadd.f32 %v215, %v341
    %v554 = vadd.f32 %v216, %v482
    %v555 = vadd.f32 %v217, %v484
    %v556 = vadd.f32 %v218, %v345
    %v557 = vadd.f32 %v219, %v347
    %v558 = vadd.f32 %v220, %v488
    %v559 = vadd.f32 %v221, %v490
    %v560 = vadd.f32 %v222, %v351
    %v561 = vadd.f32 %v223, %v353
    %v562 = vadd.f32 %v224, %v494
    %v563 = vadd.f32 %v225, %v496
    %v564 = vadd.f32 %v226, %v357
    %v565 = vadd.f32 %v227, %v359
    %v566 = vadd.f32 %v228, %v500
    %v567 = vadd.f32 %v229, %v502
    %v568 = vadd.f32 %v230, %v363
    %v569 = vadd.f32 %v231, %v365
    %v570 = vadd.f32 %v232, %v506
    %v571 = vadd.f32 %v233, %v508
    %v572 = vadd.f32 %v234, %v369
    %v573 = vadd.f32 %v235, %v371
    %v574 = vadd.f32 %v236, %v512
    %v575 = vadd.f32 %v237, %v514
    %v576 = vadd.f32 %v238, %v375
    %v577 = vadd.f32 %v239, %v377
    %v578 = vadd.f32 %v240, %v518
    %v579 = vadd.f32 %v241, %v520
    %v580 = vadd.f32 %v242, %v381
    %v581 = vadd.f32 %v243, %v383
    %v582 = vadd.f32 %v244, %v524
    %v583 = vadd.f32 %v245, %v526
    %v584 = vadd.f32 %v246, %v387
    %v585 = vadd.f32 %v247, %v389
    %v586 = vadd.f32 %v248, %v530
    %v587 = vadd.f32 %v249, %v532
    %v588 = vadd.f32 %v250, %v393
    %v589 = vadd.f32 %v251, %v395
    %v590 = vadd.f32 %v252, %v536
    %v591 = vadd.f32 %v253, %v538
    %592 = vst [vmem:[#allocation2] sm:$0xff] %v540
    %593 = vst [vmem:[#allocation2 + $0x8] sm:$0xff] %v541
    %594 = vst [vmem:[#allocation2 + $0x10] sm:$0xff] %v542
    %595 = vst [vmem:[#allocation2 + $0x18] sm:$0xff] %v543
    %596 = vst [vmem:[#allocation2 + $0x20] sm:$0xff] %v544
    %597 = vst [vmem:[#allocation2 + $0x28] sm:$0xff] %v545
    %598 = vst [vmem:[#allocation2 + $0x30] sm:$0xff] %v546
    %599 = vst [vmem:[#allocation2 + $0x38] sm:$0xff] %v547
    %600 = vst [vmem:[#allocation2 + $0x40] sm:$0xff] %v548
    %601 = vst [vmem:[#allocation2 + $0x48] sm:$0xff] %v549
    %602 = vst [vmem:[#allocation2 + $0x50] sm:$0xff] %v550
    %603 = vst [vmem:[#allocation2 + $0x58] sm:$0xff] %v551
    %604 = vst [vmem:[#allocation2 + $0x60] sm:$0xff] %v552
    %605 = vst [vmem:[#allocation2 + $0x68] sm:$0xff] %v553
    %606 = vst [vmem:[#allocation2 + $0x70] sm:$0xff] %v554
    %607 = vst [vmem:[#allocation2 + $0x78] sm:$0xff] %v555
    %608 = vst [vmem:[#allocation2 + $0x80] sm:$0xff] %v556
    %609 = vst [vmem:[#allocation2 + $0x88] sm:$0xff] %v557
    %610 = vst [vmem:[#allocation2 + $0x90] sm:$0xff] %v558
    %611 = vst [vmem:[#allocation2 + $0x98] sm:$0xff] %v559
    %612 = vst [vmem:[#allocation2 + $0xa0] sm:$0xff] %v560
    %613 = vst [vmem:[#allocation2 + $0xa8] sm:$0xff] %v561
    %614 = vst [vmem:[#allocation2 + $0xb0] sm:$0xff] %v562
    %615 = vst [vmem:[#allocation2 + $0xb8] sm:$0xff] %v563
    %616 = vst [vmem:[#allocation2 + $0xc0] sm:$0xff] %v564
    %617 = vst [vmem:[#allocation2 + $0xc8] sm:$0xff] %v565
    %618 = vst [vmem:[#allocation2 + $0xd0] sm:$0xff] %v566
    %619 = vst [vmem:[#allocation2 + $0xd8] sm:$0xff] %v567
    %620 = vst [vmem:[#allocation2 + $0xe0] sm:$0xff] %v568
    %621 = vst [vmem:[#allocation2 + $0xe8] sm:$0xff] %v569
    %622 = vst [vmem:[#allocation2 + $0xf0] sm:$0xff] %v570
    %623 = vst [vmem:[#allocation2 + $0xf8] sm:$0xff] %v571
    %624 = vst [vmem:[#allocation2 + $0x100] sm:$0xff] %v572
    %625 = vst [vmem:[#allocation2 + $0x108] sm:$0xff] %v573
    %626 = vst [vmem:[#allocation2 + $0x110] sm:$0xff] %v574
    %627 = vst [vmem:[#allocation2 + $0x118] sm:$0xff] %v575
    %628 = vst [vmem:[#allocation2 + $0x120] sm:$0xff] %v576
    %629 = vst [vmem:[#allocation2 + $0x128] sm:$0xff] %v577
    %630 = vst [vmem:[#allocation2 + $0x130] sm:$0xff] %v578
    %631 = vst [vmem:[#allocation2 + $0x138] sm:$0xff] %v579
    %632 = vst [vmem:[#allocation2 + $0x140] sm:$0xff] %v580
    %633 = vst [vmem:[#allocation2 + $0x148] sm:$0xff] %v581
    %634 = vst [vmem:[#allocation2 + $0x150] sm:$0xff] %v582
    %635 = vst [vmem:[#allocation2 + $0x158] sm:$0xff] %v583
    %636 = vst [vmem:[#allocation2 + $0x160] sm:$0xff] %v584
    %637 = vst [vmem:[#allocation2 + $0x168] sm:$0xff] %v585
    %638 = vst [vmem:[#allocation2 + $0x170] sm:$0xff] %v586
    %639 = vst [vmem:[#allocation2 + $0x178] sm:$0xff] %v587
    %640 = vst [vmem:[#allocation2 + $0x180] sm:$0x3] %v588
    %641 = vst [vmem:[#allocation2 + $0x188] sm:$0x3] %v589
    %642 = vst [vmem:[#allocation2 + $0x190] sm:$0x3] %v590
    %643 = vst [vmem:[#allocation2 + $0x198] sm:$0x3] %v591
    // Predicated region
    $region38: #{tpu_custom_call.1} parent=1 // pred_check
      %p644 = pneg %p69
    $region39: #{tpu_custom_call.1} parent=1 // pred_check_branch
      %646 = sbr.rel (%p644) target = $region41
    $region40: #{tpu_custom_call.1} parent=1 // pred_region
      %v647 = vld [vmem:[#allocation2] sm:$0xff]
      %v648 = vld [vmem:[#allocation2 + $0x8] sm:$0xff]
      %v649 = vld [vmem:[#allocation2 + $0x10] sm:$0xff]
      %v650 = vld [vmem:[#allocation2 + $0x18] sm:$0xff]
      %v651 = vld [vmem:[#allocation2 + $0x20] sm:$0xff]
      %v652 = vld [vmem:[#allocation2 + $0x28] sm:$0xff]
      %v653 = vld [vmem:[#allocation2 + $0x30] sm:$0xff]
      %v654 = vld [vmem:[#allocation2 + $0x38] sm:$0xff]
      %v655 = vld [vmem:[#allocation2 + $0x40] sm:$0xff]
      %v656 = vld [vmem:[#allocation2 + $0x48] sm:$0xff]
      %v657 = vld [vmem:[#allocation2 + $0x50] sm:$0xff]
      %v658 = vld [vmem:[#allocation2 + $0x58] sm:$0xff]
      %v659 = vld [vmem:[#allocation2 + $0x60] sm:$0xff]
      %v660 = vld [vmem:[#allocation2 + $0x68] sm:$0xff]
      %v661 = vld [vmem:[#allocation2 + $0x70] sm:$0xff]
      %v662 = vld [vmem:[#allocation2 + $0x78] sm:$0xff]
      %v663 = vld [vmem:[#allocation2 + $0x80] sm:$0xff]
      %v664 = vld [vmem:[#allocation2 + $0x88] sm:$0xff]
      %v665 = vld [vmem:[#allocation2 + $0x90] sm:$0xff]
      %v666 = vld [vmem:[#allocation2 + $0x98] sm:$0xff]
      %v667 = vld [vmem:[#allocation2 + $0xa0] sm:$0xff]
      %v668 = vld [vmem:[#allocation2 + $0xa8] sm:$0xff]
      %v669 = vld [vmem:[#allocation2 + $0xb0] sm:$0xff]
      %v670 = vld [vmem:[#allocation2 + $0xb8] sm:$0xff]
      %v671 = vld [vmem:[#allocation2 + $0xc0] sm:$0xff]
      %v672 = vld [vmem:[#allocation2 + $0xc8] sm:$0xff]
      %v673 = vld [vmem:[#allocation2 + $0xd0] sm:$0xff]
      %v674 = vld [vmem:[#allocation2 + $0xd8] sm:$0xff]
      %v675 = vld [vmem:[#allocation2 + $0xe0] sm:$0xff]
      %v676 = vld [vmem:[#allocation2 + $0xe8] sm:$0xff]
      %v677 = vld [vmem:[#allocation2 + $0xf0] sm:$0xff]
      %v678 = vld [vmem:[#allocation2 + $0xf8] sm:$0xff]
      %v679 = vld [vmem:[#allocation2 + $0x100] sm:$0xff]
      %v680 = vld [vmem:[#allocation2 + $0x108] sm:$0xff]
      %v681 = vld [vmem:[#allocation2 + $0x110] sm:$0xff]
      %v682 = vld [vmem:[#allocation2 + $0x118] sm:$0xff]
      %v683 = vld [vmem:[#allocation2 + $0x120] sm:$0xff]
      %v684 = vld [vmem:[#allocation2 + $0x128] sm:$0xff]
      %v685 = vld [vmem:[#allocation2 + $0x130] sm:$0xff]
      %v686 = vld [vmem:[#allocation2 + $0x138] sm:$0xff]
      %v687 = vld [vmem:[#allocation2 + $0x140] sm:$0xff]
      %v688 = vld [vmem:[#allocation2 + $0x148] sm:$0xff]
      %v689 = vld [vmem:[#allocation2 + $0x150] sm:$0xff]
      %v690 = vld [vmem:[#allocation2 + $0x158] sm:$0xff]
      %v691 = vld [vmem:[#allocation2 + $0x160] sm:$0xff]
      %v692 = vld [vmem:[#allocation2 + $0x168] sm:$0xff]
      %v693 = vld [vmem:[#allocation2 + $0x170] sm:$0xff]
      %v694 = vld [vmem:[#allocation2 + $0x178] sm:$0xff]
      %v695 = vld [vmem:[#allocation2 + $0x180] sm:$0x3]
      %v696 = vld [vmem:[#allocation2 + $0x188] sm:$0x3]
      %v697 = vld [vmem:[#allocation2 + $0x190] sm:$0x3]
      %v698 = vld [vmem:[#allocation2 + $0x198] sm:$0x3]
      %v699 = vld [vmem:[#allocation8] sm:$0xf]
      %v701 = vlaneseq
      %v702 = vshrl.u32 %v701, 7
      %v703 = vsub.s32 0, %v702
      %v704 = vrot.slane %v699, %v703
      %v705 = vlaneseq
      %v706 = vshrl.u32 %v705, 7
      %v707 = vsub.s32 1, %v706
      %v708 = vrot.slane %v699, %v707
      %v709 = vlaneseq
      %v710 = vshrl.u32 %v709, 7
      %v711 = vsub.s32 2, %v710
      %v712 = vrot.slane %v699, %v711
      %v713 = vlaneseq
      %v714 = vshrl.u32 %v713, 7
      %v715 = vsub.s32 3, %v714
      %v716 = vrot.slane %v699, %v715
      %v721 = vmul.f32 %v647, %v704
      %v722 = vmul.f32 %v648, %v708
      %v723 = vmul.f32 %v649, %v712
      %v724 = vmul.f32 %v650, %v716
      %v725 = vmul.f32 %v651, %v704
      %v726 = vmul.f32 %v652, %v708
      %v727 = vmul.f32 %v653, %v712
      %v728 = vmul.f32 %v654, %v716
      %v729 = vmul.f32 %v655, %v704
      %v730 = vmul.f32 %v656, %v708
      %v731 = vmul.f32 %v657, %v712
      %v732 = vmul.f32 %v658, %v716
      %v733 = vmul.f32 %v659, %v704
      %v734 = vmul.f32 %v660, %v708
      %v735 = vmul.f32 %v661, %v712
      %v736 = vmul.f32 %v662, %v716
      %v737 = vmul.f32 %v663, %v704
      %v738 = vmul.f32 %v664, %v708
      %v739 = vmul.f32 %v665, %v712
      %v740 = vmul.f32 %v666, %v716
      %v741 = vmul.f32 %v667, %v704
      %v742 = vmul.f32 %v668, %v708
      %v743 = vmul.f32 %v669, %v712
      %v744 = vmul.f32 %v670, %v716
      %v745 = vmul.f32 %v671, %v704
      %v746 = vmul.f32 %v672, %v708
      %v747 = vmul.f32 %v673, %v712
      %v748 = vmul.f32 %v674, %v716
      %v749 = vmul.f32 %v675, %v704
      %v750 = vmul.f32 %v676, %v708
      %v751 = vmul.f32 %v677, %v712
      %v752 = vmul.f32 %v678, %v716
      %v753 = vmul.f32 %v679, %v704
      %v754 = vmul.f32 %v680, %v708
      %v755 = vmul.f32 %v681, %v712
      %v756 = vmul.f32 %v682, %v716
      %v757 = vmul.f32 %v683, %v704
      %v758 = vmul.f32 %v684, %v708
      %v759 = vmul.f32 %v685, %v712
      %v760 = vmul.f32 %v686, %v716
      %v761 = vmul.f32 %v687, %v704
      %v762 = vmul.f32 %v688, %v708
      %v763 = vmul.f32 %v689, %v712
      %v764 = vmul.f32 %v690, %v716
      %v765 = vmul.f32 %v691, %v704
      %v766 = vmul.f32 %v692, %v708
      %v767 = vmul.f32 %v693, %v712
      %v768 = vmul.f32 %v694, %v716
      %v769 = vmul.f32 %v695, %v704
      %v770 = vmul.f32 %v696, %v708
      %v771 = vmul.f32 %v697, %v712
      %v772 = vmul.f32 %v698, %v716
      %v773 = vld [vmem:[#allocation9] sm:$0xf]
      %v775 = vlaneseq
      %v776 = vshrl.u32 %v775, 7
      %v777 = vsub.s32 0, %v776
      %v778 = vrot.slane %v773, %v777
      %v779 = vlaneseq
      %v780 = vshrl.u32 %v779, 7
      %v781 = vsub.s32 1, %v780
      %v782 = vrot.slane %v773, %v781
      %v783 = vlaneseq
      %v784 = vshrl.u32 %v783, 7
      %v785 = vsub.s32 2, %v784
      %v786 = vrot.slane %v773, %v785
      %v787 = vlaneseq
      %v788 = vshrl.u32 %v787, 7
      %v789 = vsub.s32 3, %v788
      %v790 = vrot.slane %v773, %v789
      %v795 = vadd.f32 %v721, %v778
      %v796 = vadd.f32 %v722, %v782
      %v797 = vadd.f32 %v723, %v786
      %v798 = vadd.f32 %v724, %v790
      %v799 = vadd.f32 %v725, %v778
      %v800 = vadd.f32 %v726, %v782
      %v801 = vadd.f32 %v727, %v786
      %v802 = vadd.f32 %v728, %v790
      %v803 = vadd.f32 %v729, %v778
      %v804 = vadd.f32 %v730, %v782
      %v805 = vadd.f32 %v731, %v786
      %v806 = vadd.f32 %v732, %v790
      %v807 = vadd.f32 %v733, %v778
      %v808 = vadd.f32 %v734, %v782
      %v809 = vadd.f32 %v735, %v786
      %v810 = vadd.f32 %v736, %v790
      %v811 = vadd.f32 %v737, %v778
      %v812 = vadd.f32 %v738, %v782
      %v813 = vadd.f32 %v739, %v786
      %v814 = vadd.f32 %v740, %v790
      %v815 = vadd.f32 %v741, %v778
      %v816 = vadd.f32 %v742, %v782
      %v817 = vadd.f32 %v743, %v786
      %v818 = vadd.f32 %v744, %v790
      %v819 = vadd.f32 %v745, %v778
      %v820 = vadd.f32 %v746, %v782
      %v821 = vadd.f32 %v747, %v786
      %v822 = vadd.f32 %v748, %v790
      %v823 = vadd.f32 %v749, %v778
      %v824 = vadd.f32 %v750, %v782
      %v825 = vadd.f32 %v751, %v786
      %v826 = vadd.f32 %v752, %v790
      %v827 = vadd.f32 %v753, %v778
      %v828 = vadd.f32 %v754, %v782
      %v829 = vadd.f32 %v755, %v786
      %v830 = vadd.f32 %v756, %v790
      %v831 = vadd.f32 %v757, %v778
      %v832 = vadd.f32 %v758, %v782
      %v833 = vadd.f32 %v759, %v786
      %v834 = vadd.f32 %v760, %v790
      %v835 = vadd.f32 %v761, %v778
      %v836 = vadd.f32 %v762, %v782
      %v837 = vadd.f32 %v763, %v786
      %v838 = vadd.f32 %v764, %v790
      %v839 = vadd.f32 %v765, %v778
      %v840 = vadd.f32 %v766, %v782
      %v841 = vadd.f32 %v767, %v786
      %v842 = vadd.f32 %v768, %v790
      %v843 = vadd.f32 %v769, %v778
      %v844 = vadd.f32 %v770, %v782
      %v845 = vadd.f32 %v771, %v786
      %v846 = vadd.f32 %v772, %v790
      %v847 = vmax.f32 %v795, 0.0
      %v848 = vmax.f32 %v796, 0.0
      %v849 = vmax.f32 %v797, 0.0
      %v850 = vmax.f32 %v798, 0.0
      %v851 = vmax.f32 %v799, 0.0
      %v852 = vmax.f32 %v800, 0.0
      %v853 = vmax.f32 %v801, 0.0
      %v854 = vmax.f32 %v802, 0.0
      %v855 = vmax.f32 %v803, 0.0
      %v856 = vmax.f32 %v804, 0.0
      %v857 = vmax.f32 %v805, 0.0
      %v858 = vmax.f32 %v806, 0.0
      %v859 = vmax.f32 %v807, 0.0
      %v860 = vmax.f32 %v808, 0.0
      %v861 = vmax.f32 %v809, 0.0
      %v862 = vmax.f32 %v810, 0.0
      %v863 = vmax.f32 %v811, 0.0
      %v864 = vmax.f32 %v812, 0.0
      %v865 = vmax.f32 %v813, 0.0
      %v866 = vmax.f32 %v814, 0.0
      %v867 = vmax.f32 %v815, 0.0
      %v868 = vmax.f32 %v816, 0.0
      %v869 = vmax.f32 %v817, 0.0
      %v870 = vmax.f32 %v818, 0.0
      %v871 = vmax.f32 %v819, 0.0
      %v872 = vmax.f32 %v820, 0.0
      %v873 = vmax.f32 %v821, 0.0
      %v874 = vmax.f32 %v822, 0.0
      %v875 = vmax.f32 %v823, 0.0
      %v876 = vmax.f32 %v824, 0.0
      %v877 = vmax.f32 %v825, 0.0
      %v878 = vmax.f32 %v826, 0.0
      %v879 = vmax.f32 %v827, 0.0
      %v880 = vmax.f32 %v828, 0.0
      %v881 = vmax.f32 %v829, 0.0
      %v882 = vmax.f32 %v830, 0.0
      %v883 = vmax.f32 %v831, 0.0
      %v884 = vmax.f32 %v832, 0.0
      %v885 = vmax.f32 %v833, 0.0
      %v886 = vmax.f32 %v834, 0.0
      %v887 = vmax.f32 %v835, 0.0
      %v888 = vmax.f32 %v836, 0.0
      %v889 = vmax.f32 %v837, 0.0
      %v890 = vmax.f32 %v838, 0.0
      %v891 = vmax.f32 %v839, 0.0
      %v892 = vmax.f32 %v840, 0.0
      %v893 = vmax.f32 %v841, 0.0
      %v894 = vmax.f32 %v842, 0.0
      %v895 = vmax.f32 %v843, 0.0
      %v896 = vmax.f32 %v844, 0.0
      %v897 = vmax.f32 %v845, 0.0
      %v898 = vmax.f32 %v846, 0.0
      %899 = vst [vmem:[#allocation11] sm:$0xff] %v847
      %900 = vst [vmem:[#allocation11 + $0x8] sm:$0xff] %v848
      %901 = vst [vmem:[#allocation11 + $0x10] sm:$0xff] %v849
      %902 = vst [vmem:[#allocation11 + $0x18] sm:$0xff] %v850
      %903 = vst [vmem:[#allocation11 + $0x20] sm:$0xff] %v851
      %904 = vst [vmem:[#allocation11 + $0x28] sm:$0xff] %v852
      %905 = vst [vmem:[#allocation11 + $0x30] sm:$0xff] %v853
      %906 = vst [vmem:[#allocation11 + $0x38] sm:$0xff] %v854
      %907 = vst [vmem:[#allocation11 + $0x40] sm:$0xff] %v855
      %908 = vst [vmem:[#allocation11 + $0x48] sm:$0xff] %v856
      %909 = vst [vmem:[#allocation11 + $0x50] sm:$0xff] %v857
      %910 = vst [vmem:[#allocation11 + $0x58] sm:$0xff] %v858
      %911 = vst [vmem:[#allocation11 + $0x60] sm:$0xff] %v859
      %912 = vst [vmem:[#allocation11 + $0x68] sm:$0xff] %v860
      %913 = vst [vmem:[#allocation11 + $0x70] sm:$0xff] %v861
      %914 = vst [vmem:[#allocation11 + $0x78] sm:$0xff] %v862
      %915 = vst [vmem:[#allocation11 + $0x80] sm:$0xff] %v863
      %916 = vst [vmem:[#allocation11 + $0x88] sm:$0xff] %v864
      %917 = vst [vmem:[#allocation11 + $0x90] sm:$0xff] %v865
      %918 = vst [vmem:[#allocation11 + $0x98] sm:$0xff] %v866
      %919 = vst [vmem:[#allocation11 + $0xa0] sm:$0xff] %v867
      %920 = vst [vmem:[#allocation11 + $0xa8] sm:$0xff] %v868
      %921 = vst [vmem:[#allocation11 + $0xb0] sm:$0xff] %v869
      %922 = vst [vmem:[#allocation11 + $0xb8] sm:$0xff] %v870
      %923 = vst [vmem:[#allocation11 + $0xc0] sm:$0xff] %v871
      %924 = vst [vmem:[#allocation11 + $0xc8] sm:$0xff] %v872
      %925 = vst [vmem:[#allocation11 + $0xd0] sm:$0xff] %v873
      %926 = vst [vmem:[#allocation11 + $0xd8] sm:$0xff] %v874
      %927 = vst [vmem:[#allocation11 + $0xe0] sm:$0xff] %v875
      %928 = vst [vmem:[#allocation11 + $0xe8] sm:$0xff] %v876
      %929 = vst [vmem:[#allocation11 + $0xf0] sm:$0xff] %v877
      %930 = vst [vmem:[#allocation11 + $0xf8] sm:$0xff] %v878
      %931 = vst [vmem:[#allocation11 + $0x100] sm:$0xff] %v879
      %932 = vst [vmem:[#allocation11 + $0x108] sm:$0xff] %v880
      %933 = vst [vmem:[#allocation11 + $0x110] sm:$0xff] %v881
      %934 = vst [vmem:[#allocation11 + $0x118] sm:$0xff] %v882
      %935 = vst [vmem:[#allocation11 + $0x120] sm:$0xff] %v883
      %936 = vst [vmem:[#allocation11 + $0x128] sm:$0xff] %v884
      %937 = vst [vmem:[#allocation11 + $0x130] sm:$0xff] %v885
      %938 = vst [vmem:[#allocation11 + $0x138] sm:$0xff] %v886
      %939 = vst [vmem:[#allocation11 + $0x140] sm:$0xff] %v887
      %940 = vst [vmem:[#allocation11 + $0x148] sm:$0xff] %v888
      %941 = vst [vmem:[#allocation11 + $0x150] sm:$0xff] %v889
      %942 = vst [vmem:[#allocation11 + $0x158] sm:$0xff] %v890
      %943 = vst [vmem:[#allocation11 + $0x160] sm:$0xff] %v891
      %944 = vst [vmem:[#allocation11 + $0x168] sm:$0xff] %v892
      %945 = vst [vmem:[#allocation11 + $0x170] sm:$0xff] %v893
      %946 = vst [vmem:[#allocation11 + $0x178] sm:$0xff] %v894
      %947 = vst [vmem:[#allocation11 + $0x180] sm:$0x3] %v895
      %948 = vst [vmem:[#allocation11 + $0x188] sm:$0x3] %v896
      %949 = vst [vmem:[#allocation11 + $0x190] sm:$0x3] %v897
      %950 = vst [vmem:[#allocation11 + $0x198] sm:$0x3] %v898
    $region41: #{tpu_custom_call.1} parent=1 // pred_fallthru
      _
    // Predicated region
    $region42: #{tpu_custom_call.1} parent=1 // pred_check
      _
    $region43: #{tpu_custom_call.1} parent=1 // pred_check_branch
      %952 = sbr.rel (0) target = $region45
    $region44: #{tpu_custom_call.1} parent=1 // pred_region
      %s954 = ssub.s32 6656, 6656
      %955 = vsyncadd [#allocation5], %s954
      %s956 = sshll.u32 [#allocation11], 4
      %s957 = int_to_ptr.vmem [resolvable:$true] %s956
      %962 = dma.vmem_to_hbm [thread:$0]  %s957, 6656, %s4, [#allocation5], 512, 512, 32
    $region45: #{tpu_custom_call.1} parent=1 // pred_fallthru
      _
    // Predicated region
    $region46: #{tpu_custom_call.1} parent=1 // pred_check
      _
    $region47: #{tpu_custom_call.1} parent=1 // pred_check_branch
      %964 = sbr.rel (0) target = $region49
    $region48: #{tpu_custom_call.1} parent=1 // pred_region
      %965 = dma.done [#allocation5], 6656
    $region49: #{tpu_custom_call.1} parent=1 // pred_fallthru
      _
    %966 = vsyncpa [#allocation4], 1
    %967 = vsyncpa [#allocation7], 1
    %968 = vsyncpa [#allocation10], 1
    %969 = vsyncpa [#allocation5], 1

</llo_original>
